<compile_context>
chip_gen: v7x
topology: tpu7x:2x2x1
jax: 0.10.0
libtpu: 0.0.40
codegen_flags: <defaults>
</compile_context>

<pallas_src>
import jax
import jax.numpy as jnp
from jax.experimental import pallas as pl
from jax.experimental.pallas import tpu as pltpu


def _round_up(x, m):
    return (x + m - 1) // m * m


def _conv1x1_sigmoid_kernel(x_ref, w_ref, b_ref, o_ref):
    # x_ref: (tm, Cin) f32, w_ref: (Cin, Cout_pad) bf16,
    # b_ref: (1, Cout_pad) f32, o_ref: (tm, Cout) f32 with Cout <= Cout_pad.
    acc = jnp.dot(
        x_ref[...].astype(jnp.bfloat16),      # bf16 MXU-native inputs
        w_ref[...],
        preferred_element_type=jnp.float32,   # f32 accumulation
    )
    z = acc + b_ref[...]                      # bias broadcast over rows (f32)
    # sigmoid = 1 / (1 + exp(-z)): exp + approx reciprocal both run on the EUP.
    sig = pl.reciprocal(1.0 + jnp.exp(-z), approx=True)
    cout = o_ref.shape[-1]
    # Drop the lane padding at the store; no post-kernel slice op needed.
    o_ref[...] = sig[:, :cout].astype(o_ref.dtype)


def prepare_conv1x1_params(weight_oihw, bias, lane=128):
    """One-time (init-time) parameter re-layout.

    weight_oihw: (Cout, Cin, 1, 1) f32 -> (Cin, Cout_pad) bf16
    bias:        (Cout,)           f32 -> (1,  Cout_pad)  f32
    """
    cout, cin = weight_oihw.shape[0], weight_oihw.shape[1]
    cout_pad = _round_up(cout, lane)

    w_mat = jnp.transpose(weight_oihw.reshape(cout, cin), (1, 0))  # (Cin, Cout)
    w_mat = jnp.pad(w_mat, ((0, 0), (0, cout_pad - cout))).astype(jnp.bfloat16)

    b_mat = jnp.pad(bias.reshape(1, cout), ((0, 0), (0, cout_pad - cout)))
    b_mat = b_mat.astype(jnp.float32)
    return w_mat, b_mat, cout


def conv2d_1x1_sigmoid(x_nchw, w_mat, b_mat, cout, tile_m=512):
    """x_nchw: (N, Cin, H, W) f32; w_mat: (Cin, Cout_pad) bf16;
    b_mat: (1, Cout_pad) f32; returns (N, Cout, H, W) f32."""
    n, cin, h, w = x_nchw.shape
    cout_pad = w_mat.shape[1]
    m = n * h * w

    # NCHW -> (M, Cin). For the 1x1-spatial case this is a pure bitcast.
    if h == 1 and w == 1:
        x_mat = x_nchw.reshape(m, cin)
    else:
        x_mat = jnp.transpose(x_nchw, (0, 2, 3, 1)).reshape(m, cin)

    tm = m if m <= tile_m else tile_m
    gm = pl.cdiv(m, tm)

    cost = pl.CostEstimate(
        flops=2 * m * cin * cout_pad,
        transcendentals=m * cout_pad,
        bytes_accessed=(
            x_mat.size * 4 + w_mat.size * 2 + b_mat.size * 4 + m * cout * 4
        ),
    )

    out_mat = pl.pallas_call(
        _conv1x1_sigmoid_kernel,
        out_shape=jax.ShapeDtypeStruct((m, cout), jnp.float32),
        grid=(gm,),
        in_specs=[
            pl.BlockSpec((tm, cin), lambda i: (i, 0)),         # activations
            pl.BlockSpec((cin, cout_pad), lambda i: (0, 0)),   # weight (resident)
            pl.BlockSpec((1, cout_pad), lambda i: (0, 0)),     # bias   (resident)
        ],
        out_specs=pl.BlockSpec((tm, cout), lambda i: (i, 0)),
        compiler_params=pltpu.CompilerParams(
            dimension_semantics=("parallel",),
        ),
        cost_estimate=cost,
    )(x_mat, w_mat, b_mat)

    # (M, Cout) -> NCHW; bitcast reshape in the 1x1-spatial case.
    if h == 1 and w == 1:
        return out_mat.reshape(n, cout, 1, 1)
    return out_mat.reshape(n, h, w, cout).transpose(0, 3, 1, 2)


if __name__ == "__main__":
    key = jax.random.PRNGKey(0)
    k_x, k_w, k_b = jax.random.split(key, 3)

    N, CIN, H, W = 1, 56, 1, 1
    COUT = 1344

    # Deterministic synthetic inputs / parameters (PyTorch-like uniform init).
    x = jax.random.normal(k_x, (N, CIN, H, W), dtype=jnp.float32)
    bound = 1.0 / (CIN ** 0.5)
    weight = jax.random.uniform(k_w, (COUT, CIN, 1, 1), jnp.float32, -bound, bound)
    bias = jax.random.uniform(k_b, (COUT,), jnp.float32, -bound, bound)

    # One-time parameter prep (layout + bf16 + lane padding), done at init time.
    w_mat, b_mat, cout = prepare_conv1x1_params(weight, bias)

    run = jax.jit(lambda xx: conv2d_1x1_sigmoid(xx, w_mat, b_mat, cout))
    out = jax.block_until_ready(run(x))

    # Reference in plain JAX using the same bf16-quantized operands.
    x_mat = x.reshape(N, CIN)
    x_q = x_mat.astype(jnp.bfloat16).astype(jnp.float32)
    w_q = w_mat[:, :COUT].astype(jnp.float32)
    ref = jax.nn.sigmoid(x_q @ w_q + bias).reshape(N, COUT, 1, 1)

    assert out.shape == (N, COUT, H, W), out.shape
    assert out.dtype == jnp.float32, out.dtype
    assert jnp.allclose(out, ref, atol=2e-3, rtol=2e-3), "mismatch vs reference"

    print("KERNEL_OK")
</pallas_src>

<mosaic_0001>
module attributes {stable_mosaic.version = 11 : i64} {
  func.func @_conv1x1_sigmoid_kernel(%arg0: i32, %arg1: memref<1x56xf32, #tpu.memory_space<vmem>>, %arg2: memref<56x1408xbf16, #tpu.memory_space<vmem>>, %arg3: memref<1x1408xf32, #tpu.memory_space<vmem>>, %arg4: memref<1x1344xf32, #tpu.memory_space<vmem>>) attributes {dimension_semantics = [#tpu.dimension_semantics<parallel>], iteration_bounds = array<i64: 1>, scalar_prefetch = 0 : i64, scratch_operands = 0 : i64, tpu.core_type = #tpu.core_type<tc>, window_params = [{transform_indices = @transform_0, window_bounds = array<i64: 1, 56>}, {pipeline_mode = #tpu.pipeline_mode<synchronous>, transform_indices = @transform_1, window_bounds = array<i64: 56, 1408>}, {pipeline_mode = #tpu.pipeline_mode<synchronous>, transform_indices = @transform_2, window_bounds = array<i64: 1, 1408>}, {transform_indices = @transform_3, window_bounds = array<i64: 1, 1344>}]} {
    %c0 = arith.constant 0 : index
    %c0_0 = arith.constant 0 : index
    %0 = vector.load %arg1[%c0, %c0_0] : memref<1x56xf32, #tpu.memory_space<vmem>>, vector<1x56xf32>
    %1 = arith.truncf %0 : vector<1x56xf32> to vector<1x56xbf16>
    %c0_1 = arith.constant 0 : index
    %c0_2 = arith.constant 0 : index
    %2 = vector.load %arg2[%c0_1, %c0_2] : memref<56x1408xbf16, #tpu.memory_space<vmem>>, vector<56x1408xbf16>
    %cst = arith.constant dense<0.000000e+00> : vector<1x1408xf32>
    %3 = tpu.matmul %1, %2, %cst {dimension_numbers = #tpu.dot_dimension_numbers<[1], [0], [0], [1], [0, 0, 1, 1], [], []>} : vector<1x56xbf16>, vector<56x1408xbf16>, vector<1x1408xf32> -> vector<1x1408xf32>
    %c0_3 = arith.constant 0 : index
    %c0_4 = arith.constant 0 : index
    %4 = vector.load %arg3[%c0_3, %c0_4] : memref<1x1408xf32, #tpu.memory_space<vmem>>, vector<1x1408xf32>
    %5 = arith.addf %3, %4 : vector<1x1408xf32>
    %cst_5 = arith.constant 0.000000e+00 : f32
    %6 = vector.broadcast %cst_5 : f32 to vector<1x1408xf32>
    %7 = arith.subf %6, %5 : vector<1x1408xf32>
    %8 = math.exp %7 : vector<1x1408xf32>
    %cst_6 = arith.constant 1.000000e+00 : f32
    %9 = vector.broadcast %cst_6 : f32 to vector<1x1408xf32>
    %10 = arith.addf %9, %8 : vector<1x1408xf32>
    %11 = tpu.reciprocal %10 {approx = true} : vector<1x1408xf32> -> vector<1x1408xf32>
    %12 = vector.extract_strided_slice %11 {offsets = [0, 0], sizes = [1, 1344], strides = [1, 1]} : vector<1x1408xf32> to vector<1x1344xf32>
    %c0_7 = arith.constant 0 : index
    %c0_8 = arith.constant 0 : index
    %13 = vector.load %arg4[%c0_7, %c0_8] : memref<1x1344xf32, #tpu.memory_space<vmem>>, vector<1x1344xf32>
    tpu.vector_store %arg4[%c0_7, %c0_8], %12 {strides = array<i32>} : memref<1x1344xf32, #tpu.memory_space<vmem>>, vector<1x1344xf32>,
    return
  }
  func.func @transform_0(%arg0: i32) -> (i32, i32) {
    %c0_i32 = arith.constant 0 : i32
    %c0_i32_0 = arith.constant 0 : i32
    return %arg0, %c0_i32 : i32, i32
  }
  func.func @transform_1(%arg0: i32) -> (i32, i32) {
    %c0_i32 = arith.constant 0 : i32
    %c0_i32_0 = arith.constant 0 : i32
    %c0_i32_1 = arith.constant 0 : i32
    return %c0_i32, %c0_i32_0 : i32, i32
  }
  func.func @transform_2(%arg0: i32) -> (i32, i32) {
    %c0_i32 = arith.constant 0 : i32
    %c0_i32_0 = arith.constant 0 : i32
    %c0_i32_1 = arith.constant 0 : i32
    return %c0_i32, %c0_i32_0 : i32, i32
  }
  func.func @transform_3(%arg0: i32) -> (i32, i32) {
    %c0_i32 = arith.constant 0 : i32
    %c0_i32_0 = arith.constant 0 : i32
    return %arg0, %c0_i32 : i32, i32
  }
}

</mosaic_0001>

<llo_original>
// kernel: _lambda_.1
$region0: #{_lambda_.1}
  #allocation0 [shape = 'u32[]', space=smem, size = 0x4, offset = 0x4, fixed_abs, tag = 'smem constant byte address 0x4 - core index']
  #allocation1 [shape = 'u32[144,128]{1,0:T(1,128)}', space=vmem, size = 0x12000, scoped, tag = 'internal scratch']
  %s0 = inlined_call_operand.hbm [shape: f32[1,56], index: 0, kind: input, shape index: {}]
  %s1 = inlined_call_operand.hbm [shape: bf16[56,1408], index: 1, kind: input, shape index: {}]
  %s2 = inlined_call_operand.vmem [shape: f32[1,1408], index: 2, kind: input, shape index: {}]
  %s3 = inlined_call_operand.hbm [shape: f32[1,1344], index: 3, kind: output, shape index: {}]
  %s4 = sld [smem:[#allocation0]]
  $region30: #{_lambda_.1} parent=0
    _
  %s6 = ssub.s32 1, %s4
  %s7 = scalar_select 0, %s6, %s4
  $region1: #{_lambda_.1} parent=0
    #allocation2 [shape = 'u8[512]{0}', space=vmem, size = 0x400, scoped, tag = 'input window, operand 0, single buffered']
    #allocation3 [shape = 's32[1]{0}', space=sflag, size = 0x4, scoped, tag = 'scoped memory for _lambda_.1']
    #allocation4 [shape = 's32[1]{0}', space=sflag, size = 0x4, scoped, tag = 'scoped memory for _lambda_.1']
    #allocation5 [shape = 'u8[157696]{0}', space=vmem, size = 0x26800, scoped, tag = 'input window, operand 1, single buffered']
    #allocation6 [shape = 's32[1]{0}', space=sflag, size = 0x4, scoped, tag = 'scoped memory for _lambda_.1']
    #allocation7 [shape = 'u8[5632]{0}', space=vmem, size = 0x1800, scoped, tag = 'output window, operand 0, single buffered']
    %8 = vsyncpa [#allocation3], 0
    %9 = vsyncpa [#allocation6], 0
    %10 = vsyncpa [#allocation4], 0
    // Predicated region
    $region2: #{_lambda_.1} parent=1 // pred_check
      _
    $region3: #{_lambda_.1} parent=1 // pred_check_branch
      %12 = sbr.rel (0) target = $region5
    $region4: #{_lambda_.1} parent=1 // pred_region
      %s14 = ssub.s32 16, 16
      %15 = vsyncadd [#allocation3], %s14
      %s17 = sshll.u32 [#allocation2], 4
      %s18 = int_to_ptr.vmem [resolvable:$true] %s17
      %20 = dma.hbm_to_vmem [thread:$0]  %s0, 16, %s18, [#allocation3]
    $region5: #{_lambda_.1} parent=1 // pred_fallthru
      _
    // Predicated region
    $region6: #{_lambda_.1} parent=1 // pred_check
      _
    $region7: #{_lambda_.1} parent=1 // pred_check_branch
      %22 = sbr.rel (0) target = $region9
    $region8: #{_lambda_.1} parent=1 // pred_region
      %s24 = ssub.s32 4928, 4928
      %25 = vsyncadd [#allocation6], %s24
      %s26 = sshll.u32 [#allocation5], 4
      %s27 = int_to_ptr.vmem [resolvable:$true] %s26
      %32 = dma.hbm_to_vmem [thread:$0]  %s1, 4928, %s27, [#allocation6], 704, 704, 44
    $region9: #{_lambda_.1} parent=1 // pred_fallthru
      _
    // Predicated region
    $region10: #{_lambda_.1} parent=1 // pred_check
      _
    $region11: #{_lambda_.1} parent=1 // pred_check_branch
      %34 = sbr.rel (0) target = $region13
    $region12: #{_lambda_.1} parent=1 // pred_region
      _
    $region13: #{_lambda_.1} parent=1 // pred_fallthru
      _
    // Predicated region
    $region14: #{_lambda_.1} parent=1 // pred_check
      _
    $region15: #{_lambda_.1} parent=1 // pred_check_branch
      %36 = sbr.rel (0) target = $region17
    $region16: #{_lambda_.1} parent=1 // pred_region
      %37 = dma.done [#allocation3], 16
    $region17: #{_lambda_.1} parent=1 // pred_fallthru
      _
    // Predicated region
    $region18: #{_lambda_.1} parent=1 // pred_check
      _
    $region19: #{_lambda_.1} parent=1 // pred_check_branch
      %39 = sbr.rel (0) target = $region21
    $region20: #{_lambda_.1} parent=1 // pred_region
      %40 = dma.done [#allocation6], 4928
    $region21: #{_lambda_.1} parent=1 // pred_fallthru
      _
    %v42 = vld [vmem:[#allocation2] sm:$0x1]
    %v43 = vpack.c.bf16 %v42, %v42
    %v44 = vld [vmem:[#allocation5] sm:$0xff]
    %v45 = vld [vmem:[#allocation5 + $0x8] sm:$0xff]
    %v46 = vld [vmem:[#allocation5 + $0x10] sm:$0xff]
    %v47 = vld [vmem:[#allocation5 + $0x18] sm:$0xff]
    %v48 = vld [vmem:[#allocation5 + $0x20] sm:$0xff]
    %v49 = vld [vmem:[#allocation5 + $0x28] sm:$0xf]
    %v50 = vld [vmem:[#allocation5 + $0x2c] sm:$0xff]
    %v51 = vld [vmem:[#allocation5 + $0x34] sm:$0xff]
    %v52 = vld [vmem:[#allocation5 + $0x3c] sm:$0xff]
    %v53 = vld [vmem:[#allocation5 + $0x44] sm:$0xff]
    %v54 = vld [vmem:[#allocation5 + $0x4c] sm:$0xff]
    %v55 = vld [vmem:[#allocation5 + $0x54] sm:$0xf]
    %v56 = vld [vmem:[#allocation5 + $0x58] sm:$0xff]
    %v57 = vld [vmem:[#allocation5 + $0x60] sm:$0xff]
    %v58 = vld [vmem:[#allocation5 + $0x68] sm:$0xff]
    %v59 = vld [vmem:[#allocation5 + $0x70] sm:$0xff]
    %v60 = vld [vmem:[#allocation5 + $0x78] sm:$0xff]
    %v61 = vld [vmem:[#allocation5 + $0x80] sm:$0xf]
    %v62 = vld [vmem:[#allocation5 + $0x84] sm:$0xff]
    %v63 = vld [vmem:[#allocation5 + $0x8c] sm:$0xff]
    %v64 = vld [vmem:[#allocation5 + $0x94] sm:$0xff]
    %v65 = vld [vmem:[#allocation5 + $0x9c] sm:$0xff]
    %v66 = vld [vmem:[#allocation5 + $0xa4] sm:$0xff]
    %v67 = vld [vmem:[#allocation5 + $0xac] sm:$0xf]
    %v68 = vld [vmem:[#allocation5 + $0xb0] sm:$0xff]
    %v69 = vld [vmem:[#allocation5 + $0xb8] sm:$0xff]
    %v70 = vld [vmem:[#allocation5 + $0xc0] sm:$0xff]
    %v71 = vld [vmem:[#allocation5 + $0xc8] sm:$0xff]
    %v72 = vld [vmem:[#allocation5 + $0xd0] sm:$0xff]
    %v73 = vld [vmem:[#allocation5 + $0xd8] sm:$0xf]
    %v74 = vld [vmem:[#allocation5 + $0xdc] sm:$0xff]
    %v75 = vld [vmem:[#allocation5 + $0xe4] sm:$0xff]
    %v76 = vld [vmem:[#allocation5 + $0xec] sm:$0xff]
    %v77 = vld [vmem:[#allocation5 + $0xf4] sm:$0xff]
    %v78 = vld [vmem:[#allocation5 + $0xfc] sm:$0xff]
    %v79 = vld [vmem:[#allocation5 + $0x104] sm:$0xf]
    %v80 = vld [vmem:[#allocation5 + $0x108] sm:$0xff]
    %v81 = vld [vmem:[#allocation5 + $0x110] sm:$0xff]
    %v82 = vld [vmem:[#allocation5 + $0x118] sm:$0xff]
    %v83 = vld [vmem:[#allocation5 + $0x120] sm:$0xff]
    %v84 = vld [vmem:[#allocation5 + $0x128] sm:$0xff]
    %v85 = vld [vmem:[#allocation5 + $0x130] sm:$0xf]
    %v86 = vld [vmem:[%s2] sm:$0xff]
    %v87 = vld [vmem:[%s2 + $0x8] sm:$0x7]
    %v130 = vunpack.c.l.b16 %v44
    %v131 = vunpack.c.h.b16 %v44
    %v132 = vunpack.c.l.b16 %v45
    %v133 = vunpack.c.h.b16 %v45
    %v134 = vunpack.c.l.b16 %v46
    %v135 = vunpack.c.h.b16 %v46
    %v136 = vunpack.c.l.b16 %v47
    %v137 = vunpack.c.h.b16 %v47
    %v138 = vunpack.c.l.b16 %v48
    %v139 = vunpack.c.h.b16 %v48
    %v140 = vunpack.c.l.b16 %v49
    %v141 = vunpack.c.l.b16 %v50
    %v142 = vunpack.c.h.b16 %v50
    %v143 = vunpack.c.l.b16 %v51
    %v144 = vunpack.c.h.b16 %v51
    %v145 = vunpack.c.l.b16 %v52
    %v146 = vunpack.c.h.b16 %v52
    %v147 = vunpack.c.l.b16 %v53
    %v148 = vunpack.c.h.b16 %v53
    %v149 = vunpack.c.l.b16 %v54
    %v150 = vunpack.c.h.b16 %v54
    %v151 = vunpack.c.l.b16 %v55
    %v152 = vunpack.c.l.b16 %v56
    %v153 = vunpack.c.h.b16 %v56
    %v154 = vunpack.c.l.b16 %v57
    %v155 = vunpack.c.h.b16 %v57
    %v156 = vunpack.c.l.b16 %v58
    %v157 = vunpack.c.h.b16 %v58
    %v158 = vunpack.c.l.b16 %v59
    %v159 = vunpack.c.h.b16 %v59
    %v160 = vunpack.c.l.b16 %v60
    %v161 = vunpack.c.h.b16 %v60
    %v162 = vunpack.c.l.b16 %v61
    %v163 = vunpack.c.l.b16 %v62
    %v164 = vunpack.c.h.b16 %v62
    %v165 = vunpack.c.l.b16 %v63
    %v166 = vunpack.c.h.b16 %v63
    %v167 = vunpack.c.l.b16 %v64
    %v168 = vunpack.c.h.b16 %v64
    %v169 = vunpack.c.l.b16 %v65
    %v170 = vunpack.c.h.b16 %v65
    %v171 = vunpack.c.l.b16 %v66
    %v172 = vunpack.c.h.b16 %v66
    %v173 = vunpack.c.l.b16 %v67
    %v174 = vunpack.c.l.b16 %v68
    %v175 = vunpack.c.h.b16 %v68
    %v176 = vunpack.c.l.b16 %v69
    %v177 = vunpack.c.h.b16 %v69
    %v178 = vunpack.c.l.b16 %v70
    %v179 = vunpack.c.h.b16 %v70
    %v180 = vunpack.c.l.b16 %v71
    %v181 = vunpack.c.h.b16 %v71
    %v182 = vunpack.c.l.b16 %v72
    %v183 = vunpack.c.h.b16 %v72
    %v184 = vunpack.c.l.b16 %v73
    %v185 = vunpack.c.l.b16 %v74
    %v186 = vunpack.c.h.b16 %v74
    %v187 = vunpack.c.l.b16 %v75
    %v188 = vunpack.c.h.b16 %v75
    %v189 = vunpack.c.l.b16 %v76
    %v190 = vunpack.c.h.b16 %v76
    %v191 = vunpack.c.l.b16 %v77
    %v192 = vunpack.c.h.b16 %v77
    %v193 = vunpack.c.l.b16 %v78
    %v194 = vunpack.c.h.b16 %v78
    %v195 = vunpack.c.l.b16 %v79
    %v196 = vunpack.c.l.b16 %v80
    %v197 = vunpack.c.h.b16 %v80
    %v198 = vunpack.c.l.b16 %v81
    %v199 = vunpack.c.h.b16 %v81
    %v200 = vunpack.c.l.b16 %v82
    %v201 = vunpack.c.h.b16 %v82
    %v202 = vunpack.c.l.b16 %v83
    %v203 = vunpack.c.h.b16 %v83
    %v204 = vunpack.c.l.b16 %v84
    %v205 = vunpack.c.h.b16 %v84
    %v206 = vunpack.c.l.b16 %v85
    %v207 = vpack.c.b16 %v141, %v130
    %v208 = vpack.c.b16 %v142, %v131
    %v209 = vpack.c.b16 %v143, %v132
    %v210 = vpack.c.b16 %v144, %v133
    %v211 = vpack.c.b16 %v145, %v134
    %v212 = vpack.c.b16 %v146, %v135
    %v213 = vpack.c.b16 %v147, %v136
    %v214 = vpack.c.b16 %v148, %v137
    %v215 = vpack.c.b16 %v149, %v138
    %v216 = vpack.c.b16 %v150, %v139
    %v217 = vpack.c.b16 %v151, %v140
    %v218 = vpack.c.b16 %v163, %v152
    %v219 = vpack.c.b16 %v164, %v153
    %v220 = vpack.c.b16 %v165, %v154
    %v221 = vpack.c.b16 %v166, %v155
    %v222 = vpack.c.b16 %v167, %v156
    %v223 = vpack.c.b16 %v168, %v157
    %v224 = vpack.c.b16 %v169, %v158
    %v225 = vpack.c.b16 %v170, %v159
    %v226 = vpack.c.b16 %v171, %v160
    %v227 = vpack.c.b16 %v172, %v161
    %v228 = vpack.c.b16 %v173, %v162
    %v229 = vpack.c.b16 %v185, %v174
    %v230 = vpack.c.b16 %v186, %v175
    %v231 = vpack.c.b16 %v187, %v176
    %v232 = vpack.c.b16 %v188, %v177
    %v233 = vpack.c.b16 %v189, %v178
    %v234 = vpack.c.b16 %v190, %v179
    %v235 = vpack.c.b16 %v191, %v180
    %v236 = vpack.c.b16 %v192, %v181
    %v237 = vpack.c.b16 %v193, %v182
    %v238 = vpack.c.b16 %v194, %v183
    %v239 = vpack.c.b16 %v195, %v184
    %v240 = vpack.c.b16 %v196, %v196
    %v241 = vpack.c.b16 %v197, %v197
    %v242 = vpack.c.b16 %v198, %v198
    %v243 = vpack.c.b16 %v199, %v199
    %v244 = vpack.c.b16 %v200, %v200
    %v245 = vpack.c.b16 %v201, %v201
    %v246 = vpack.c.b16 %v202, %v202
    %v247 = vpack.c.b16 %v203, %v203
    %v248 = vpack.c.b16 %v204, %v204
    %v249 = vpack.c.b16 %v205, %v205
    %v250 = vpack.c.b16 %v206, %v206
    %v286 = vlaneseq
    %v287 = vshrl.u32 %v286, 7
    %v288 = vsub.s32 0, %v287
    %v289 = vrot.slane %v86, %v288
    %v290 = vlaneseq
    %v291 = vshrl.u32 %v290, 7
    %v292 = vsub.s32 1, %v291
    %v293 = vrot.slane %v86, %v292
    %v294 = vlaneseq
    %v295 = vshrl.u32 %v294, 7
    %v296 = vsub.s32 2, %v295
    %v297 = vrot.slane %v86, %v296
    %v298 = vlaneseq
    %v299 = vshrl.u32 %v298, 7
    %v300 = vsub.s32 3, %v299
    %v301 = vrot.slane %v86, %v300
    %v302 = vlaneseq
    %v303 = vshrl.u32 %v302, 7
    %v304 = vsub.s32 4, %v303
    %v305 = vrot.slane %v86, %v304
    %v306 = vlaneseq
    %v307 = vshrl.u32 %v306, 7
    %v308 = vsub.s32 5, %v307
    %v309 = vrot.slane %v86, %v308
    %v310 = vlaneseq
    %v311 = vshrl.u32 %v310, 7
    %v312 = vsub.s32 6, %v311
    %v313 = vrot.slane %v86, %v312
    %v314 = vlaneseq
    %v315 = vshrl.u32 %v314, 7
    %v316 = vsub.s32 7, %v315
    %v317 = vrot.slane %v86, %v316
    %v318 = vlaneseq
    %v319 = vshrl.u32 %v318, 7
    %v320 = vsub.s32 0, %v319
    %v321 = vrot.slane %v87, %v320
    %v322 = vlaneseq
    %v323 = vshrl.u32 %v322, 7
    %v324 = vsub.s32 1, %v323
    %v325 = vrot.slane %v87, %v324
    %v326 = vlaneseq
    %v327 = vshrl.u32 %v326, 7
    %v328 = vsub.s32 2, %v327
    %v329 = vrot.slane %v87, %v328
    %vm341 = vcmask 457728
    %v343 = vsel %vm341, %v43, 0
    %vm345 = vcmask 1043456
    %v347 = vsel %vm345, %v240, 0
    %v350 = vsel %vm345, %v241, 0
    %v353 = vsel %vm345, %v242, 0
    %v356 = vsel %vm345, %v243, 0
    %v359 = vsel %vm345, %v244, 0
    %v362 = vsel %vm345, %v245, 0
    %v365 = vsel %vm345, %v246, 0
    %v368 = vsel %vm345, %v247, 0
    %v371 = vsel %vm345, %v248, 0
    %v374 = vsel %vm345, %v249, 0
    %v377 = vsel %vm345, %v250, 0
    %379 = vmatprep.subr.bf16.mxu0 %v208
    %380 = vmatpush1.bf16.msra.mxu0 %v207
    %381 = vmatprep.subr.bf16.mxu0 %v219
    %382 = vmatpush1.bf16.msra.mxu0 %v218
    %383 = vmatprep.subr.bf16.mxu0 %v230
    %384 = vmatpush1.bf16.msra.mxu0 %v229
    %385 = vmatprep.subr.bf16.mxu0 %v350
    %386 = vmatpush1.bf16.msra.mxu0 %v347
    %387 = vmatprep.subr.bf16.mxu0 0
    %388 = vmatpush1.bf16.msra.mxu0 0
    %389 = vmatprep.subr.bf16.mxu0 0
    %390 = vmatpush1.bf16.msra.mxu0 0
    %391 = vmatprep.subr.bf16.mxu0 0
    %392 = vmatpush1.bf16.msra.mxu0 0
    %393 = vmatprep.subr.bf16.mxu0 0
    %394 = vmatpush1.bf16.msra.mxu0 0
    %395 = vmatprep.subr.bf16.mxu0 0
    %396 = vmatpush1.bf16.msra.mxu0 0
    %397 = vmatprep.subr.bf16.mxu0 0
    %398 = vmatpush1.bf16.msra.mxu0 0
    %399 = vmatprep.subr.bf16.mxu0 0
    %400 = vmatpush1.bf16.msra.mxu0 0
    %401 = vmatprep.subr.bf16.mxu0 0
    %402 = vmatpush1.bf16.msra.mxu0 0
    %403 = vmatprep.subr.bf16.mxu0 0
    %404 = vmatpush1.bf16.msra.mxu0 0
    %405 = vmatprep.subr.bf16.mxu0 0
    %406 = vmatpush1.bf16.msra.mxu0 0
    %407 = vmatprep.subr.bf16.mxu0 0
    %408 = vmatpush1.bf16.msra.mxu0 0
    %409 = vmatprep.subr.bf16.mxu0 0
    %410 = vmatpush1.bf16.msra.mxu0 0
    %411 = vmatprep.mubr.bf16.mxu0 0
    %412 = vmatmul.mubr.bf16.gmra.mrb[0].mxu0 %v343
    %v413 = vpop.f32.mrb[0].mxu0
    %v414 = vadd.f32 %v289, %v413
    %v415 = vpop.f32.mrb[0].mxu0
    %v416 = vadd.f32 %v293, %v415
    %v417 = vpop.f32.mrb[0].mxu0
    %v418 = vpop.f32.mrb[0].mxu0
    %419 = vdwg.mxu0
    %420 = vmatprep.subr.bf16.mxu0 %v210
    %421 = vmatpush1.bf16.msra.mxu0 %v209
    %422 = vmatprep.subr.bf16.mxu0 %v221
    %423 = vmatpush1.bf16.msra.mxu0 %v220
    %424 = vmatprep.subr.bf16.mxu0 %v232
    %425 = vmatpush1.bf16.msra.mxu0 %v231
    %426 = vmatprep.subr.bf16.mxu0 %v356
    %427 = vmatpush1.bf16.msra.mxu0 %v353
    %428 = vmatprep.subr.bf16.mxu0 0
    %429 = vmatpush1.bf16.msra.mxu0 0
    %430 = vmatprep.subr.bf16.mxu0 0
    %431 = vmatpush1.bf16.msra.mxu0 0
    %432 = vmatprep.subr.bf16.mxu0 0
    %433 = vmatpush1.bf16.msra.mxu0 0
    %434 = vmatprep.subr.bf16.mxu0 0
    %435 = vmatpush1.bf16.msra.mxu0 0
    %436 = vmatprep.subr.bf16.mxu0 0
    %437 = vmatpush1.bf16.msra.mxu0 0
    %438 = vmatprep.subr.bf16.mxu0 0
    %439 = vmatpush1.bf16.msra.mxu0 0
    %440 = vmatprep.subr.bf16.mxu0 0
    %441 = vmatpush1.bf16.msra.mxu0 0
    %442 = vmatprep.subr.bf16.mxu0 0
    %443 = vmatpush1.bf16.msra.mxu0 0
    %444 = vmatprep.subr.bf16.mxu0 0
    %445 = vmatpush1.bf16.msra.mxu0 0
    %446 = vmatprep.subr.bf16.mxu0 0
    %447 = vmatpush1.bf16.msra.mxu0 0
    %448 = vmatprep.subr.bf16.mxu0 0
    %449 = vmatpush1.bf16.msra.mxu0 0
    %450 = vmatprep.subr.bf16.mxu0 0
    %451 = vmatpush1.bf16.msra.mxu0 0
    %452 = vmatprep.mubr.bf16.mxu0 0
    %453 = vmatmul.mubr.bf16.gmra.mrb[0].mxu0 %v343
    %v454 = vpop.f32.mrb[0].mxu0
    %v455 = vadd.f32 %v297, %v454
    %v456 = vpop.f32.mrb[0].mxu0
    %v457 = vadd.f32 %v301, %v456
    %v458 = vpop.f32.mrb[0].mxu0
    %v459 = vpop.f32.mrb[0].mxu0
    %460 = vdwg.mxu0
    %461 = vmatprep.subr.bf16.mxu0 %v212
    %462 = vmatpush1.bf16.msra.mxu0 %v211
    %463 = vmatprep.subr.bf16.mxu0 %v223
    %464 = vmatpush1.bf16.msra.mxu0 %v222
    %465 = vmatprep.subr.bf16.mxu0 %v234
    %466 = vmatpush1.bf16.msra.mxu0 %v233
    %467 = vmatprep.subr.bf16.mxu0 %v362
    %468 = vmatpush1.bf16.msra.mxu0 %v359
    %469 = vmatprep.subr.bf16.mxu0 0
    %470 = vmatpush1.bf16.msra.mxu0 0
    %471 = vmatprep.subr.bf16.mxu0 0
    %472 = vmatpush1.bf16.msra.mxu0 0
    %473 = vmatprep.subr.bf16.mxu0 0
    %474 = vmatpush1.bf16.msra.mxu0 0
    %475 = vmatprep.subr.bf16.mxu0 0
    %476 = vmatpush1.bf16.msra.mxu0 0
    %477 = vmatprep.subr.bf16.mxu0 0
    %478 = vmatpush1.bf16.msra.mxu0 0
    %479 = vmatprep.subr.bf16.mxu0 0
    %480 = vmatpush1.bf16.msra.mxu0 0
    %481 = vmatprep.subr.bf16.mxu0 0
    %482 = vmatpush1.bf16.msra.mxu0 0
    %483 = vmatprep.subr.bf16.mxu0 0
    %484 = vmatpush1.bf16.msra.mxu0 0
    %485 = vmatprep.subr.bf16.mxu0 0
    %486 = vmatpush1.bf16.msra.mxu0 0
    %487 = vmatprep.subr.bf16.mxu0 0
    %488 = vmatpush1.bf16.msra.mxu0 0
    %489 = vmatprep.subr.bf16.mxu0 0
    %490 = vmatpush1.bf16.msra.mxu0 0
    %491 = vmatprep.subr.bf16.mxu0 0
    %492 = vmatpush1.bf16.msra.mxu0 0
    %493 = vmatprep.mubr.bf16.mxu0 0
    %494 = vmatmul.mubr.bf16.gmra.mrb[0].mxu0 %v343
    %v495 = vpop.f32.mrb[0].mxu0
    %v496 = vadd.f32 %v305, %v495
    %v497 = vpop.f32.mrb[0].mxu0
    %v498 = vadd.f32 %v309, %v497
    %v499 = vpop.f32.mrb[0].mxu0
    %v500 = vpop.f32.mrb[0].mxu0
    %501 = vdwg.mxu0
    %502 = vmatprep.subr.bf16.mxu0 %v214
    %503 = vmatpush1.bf16.msra.mxu0 %v213
    %504 = vmatprep.subr.bf16.mxu0 %v225
    %505 = vmatpush1.bf16.msra.mxu0 %v224
    %506 = vmatprep.subr.bf16.mxu0 %v236
    %507 = vmatpush1.bf16.msra.mxu0 %v235
    %508 = vmatprep.subr.bf16.mxu0 %v368
    %509 = vmatpush1.bf16.msra.mxu0 %v365
    %510 = vmatprep.subr.bf16.mxu0 0
    %511 = vmatpush1.bf16.msra.mxu0 0
    %512 = vmatprep.subr.bf16.mxu0 0
    %513 = vmatpush1.bf16.msra.mxu0 0
    %514 = vmatprep.subr.bf16.mxu0 0
    %515 = vmatpush1.bf16.msra.mxu0 0
    %516 = vmatprep.subr.bf16.mxu0 0
    %517 = vmatpush1.bf16.msra.mxu0 0
    %518 = vmatprep.subr.bf16.mxu0 0
    %519 = vmatpush1.bf16.msra.mxu0 0
    %520 = vmatprep.subr.bf16.mxu0 0
    %521 = vmatpush1.bf16.msra.mxu0 0
    %522 = vmatprep.subr.bf16.mxu0 0
    %523 = vmatpush1.bf16.msra.mxu0 0
    %524 = vmatprep.subr.bf16.mxu0 0
    %525 = vmatpush1.bf16.msra.mxu0 0
    %526 = vmatprep.subr.bf16.mxu0 0
    %527 = vmatpush1.bf16.msra.mxu0 0
    %528 = vmatprep.subr.bf16.mxu0 0
    %529 = vmatpush1.bf16.msra.mxu0 0
    %530 = vmatprep.subr.bf16.mxu0 0
    %531 = vmatpush1.bf16.msra.mxu0 0
    %532 = vmatprep.subr.bf16.mxu0 0
    %533 = vmatpush1.bf16.msra.mxu0 0
    %534 = vmatprep.mubr.bf16.mxu0 0
    %535 = vmatmul.mubr.bf16.gmra.mrb[0].mxu0 %v343
    %v536 = vpop.f32.mrb[0].mxu0
    %v537 = vadd.f32 %v313, %v536
    %v538 = vpop.f32.mrb[0].mxu0
    %v539 = vadd.f32 %v317, %v538
    %v540 = vpop.f32.mrb[0].mxu0
    %v541 = vpop.f32.mrb[0].mxu0
    %542 = vdwg.mxu0
    %543 = vmatprep.subr.bf16.mxu0 %v216
    %544 = vmatpush1.bf16.msra.mxu0 %v215
    %545 = vmatprep.subr.bf16.mxu0 %v227
    %546 = vmatpush1.bf16.msra.mxu0 %v226
    %547 = vmatprep.subr.bf16.mxu0 %v238
    %548 = vmatpush1.bf16.msra.mxu0 %v237
    %549 = vmatprep.subr.bf16.mxu0 %v374
    %550 = vmatpush1.bf16.msra.mxu0 %v371
    %551 = vmatprep.subr.bf16.mxu0 0
    %552 = vmatpush1.bf16.msra.mxu0 0
    %553 = vmatprep.subr.bf16.mxu0 0
    %554 = vmatpush1.bf16.msra.mxu0 0
    %555 = vmatprep.subr.bf16.mxu0 0
    %556 = vmatpush1.bf16.msra.mxu0 0
    %557 = vmatprep.subr.bf16.mxu0 0
    %558 = vmatpush1.bf16.msra.mxu0 0
    %559 = vmatprep.subr.bf16.mxu0 0
    %560 = vmatpush1.bf16.msra.mxu0 0
    %561 = vmatprep.subr.bf16.mxu0 0
    %562 = vmatpush1.bf16.msra.mxu0 0
    %563 = vmatprep.subr.bf16.mxu0 0
    %564 = vmatpush1.bf16.msra.mxu0 0
    %565 = vmatprep.subr.bf16.mxu0 0
    %566 = vmatpush1.bf16.msra.mxu0 0
    %567 = vmatprep.subr.bf16.mxu0 0
    %568 = vmatpush1.bf16.msra.mxu0 0
    %569 = vmatprep.subr.bf16.mxu0 0
    %570 = vmatpush1.bf16.msra.mxu0 0
    %571 = vmatprep.subr.bf16.mxu0 0
    %572 = vmatpush1.bf16.msra.mxu0 0
    %573 = vmatprep.subr.bf16.mxu0 0
    %574 = vmatpush1.bf16.msra.mxu0 0
    %575 = vmatprep.mubr.bf16.mxu0 0
    %576 = vmatmul.mubr.bf16.gmra.mrb[0].mxu0 %v343
    %v577 = vpop.f32.mrb[0].mxu0
    %v578 = vadd.f32 %v321, %v577
    %v579 = vpop.f32.mrb[0].mxu0
    %v580 = vadd.f32 %v325, %v579
    %v581 = vpop.f32.mrb[0].mxu0
    %v582 = vpop.f32.mrb[0].mxu0
    %583 = vdwg.mxu0
    %584 = vmatprep.subr.bf16.mxu0 0
    %585 = vmatpush1.bf16.msra.mxu0 %v217
    %586 = vmatprep.subr.bf16.mxu0 0
    %587 = vmatpush1.bf16.msra.mxu0 %v228
    %588 = vmatprep.subr.bf16.mxu0 0
    %589 = vmatpush1.bf16.msra.mxu0 %v239
    %590 = vmatprep.subr.bf16.mxu0 0
    %591 = vmatpush1.bf16.msra.mxu0 %v377
    %592 = vmatprep.subr.bf16.mxu0 0
    %593 = vmatpush1.bf16.msra.mxu0 0
    %594 = vmatprep.subr.bf16.mxu0 0
    %595 = vmatpush1.bf16.msra.mxu0 0
    %596 = vmatprep.subr.bf16.mxu0 0
    %597 = vmatpush1.bf16.msra.mxu0 0
    %598 = vmatprep.subr.bf16.mxu0 0
    %599 = vmatpush1.bf16.msra.mxu0 0
    %600 = vmatprep.subr.bf16.mxu0 0
    %601 = vmatpush1.bf16.msra.mxu0 0
    %602 = vmatprep.subr.bf16.mxu0 0
    %603 = vmatpush1.bf16.msra.mxu0 0
    %604 = vmatprep.subr.bf16.mxu0 0
    %605 = vmatpush1.bf16.msra.mxu0 0
    %606 = vmatprep.subr.bf16.mxu0 0
    %607 = vmatpush1.bf16.msra.mxu0 0
    %608 = vmatprep.subr.bf16.mxu0 0
    %609 = vmatpush1.bf16.msra.mxu0 0
    %610 = vmatprep.subr.bf16.mxu0 0
    %611 = vmatpush1.bf16.msra.mxu0 0
    %612 = vmatprep.subr.bf16.mxu0 0
    %613 = vmatpush1.bf16.msra.mxu0 0
    %614 = vmatprep.subr.bf16.mxu0 0
    %615 = vmatpush1.bf16.msra.mxu0 0
    %616 = vmatprep.mubr.bf16.mxu0 0
    %617 = vmatmul.mubr.bf16.gmra.mrb[0].mxu0 %v343
    %v618 = vpop.f32.mrb[0].mxu0
    %v619 = vadd.f32 %v329, %v618
    %v620 = vpop.f32.mrb[0].mxu0
    %v621 = vpop.f32.mrb[0].mxu0
    %v622 = vpop.f32.mrb[0].mxu0
    %623 = vdwg.mxu0
    %v624 = vsub.f32 0.0, %v414
    %v625 = vsub.f32 0.0, %v416
    %v626 = vsub.f32 0.0, %v455
    %v627 = vsub.f32 0.0, %v457
    %v628 = vsub.f32 0.0, %v496
    %v629 = vsub.f32 0.0, %v498
    %v630 = vsub.f32 0.0, %v537
    %v631 = vsub.f32 0.0, %v539
    %v632 = vsub.f32 0.0, %v578
    %v633 = vsub.f32 0.0, %v580
    %v634 = vsub.f32 0.0, %v619
    %v635 = vmul.f32 %v624, 1.442695
    %v636 = vpow.pop %v635
    %v637 = vmul.f32 %v625, 1.442695
    %v638 = vpow.pop %v637
    %v639 = vmul.f32 %v626, 1.442695
    %v640 = vpow.pop %v639
    %v641 = vmul.f32 %v627, 1.442695
    %v642 = vpow.pop %v641
    %v643 = vmul.f32 %v628, 1.442695
    %v644 = vpow.pop %v643
    %v645 = vmul.f32 %v629, 1.442695
    %v646 = vpow.pop %v645
    %v647 = vmul.f32 %v630, 1.442695
    %v648 = vpow.pop %v647
    %v649 = vmul.f32 %v631, 1.442695
    %v650 = vpow.pop %v649
    %v651 = vmul.f32 %v632, 1.442695
    %v652 = vpow.pop %v651
    %v653 = vmul.f32 %v633, 1.442695
    %v654 = vpow.pop %v653
    %v655 = vmul.f32 %v634, 1.442695
    %v656 = vpow.pop %v655
    %v657 = vadd.f32 %v636, 1.0
    %v658 = vadd.f32 %v638, 1.0
    %v659 = vadd.f32 %v640, 1.0
    %v660 = vadd.f32 %v642, 1.0
    %v661 = vadd.f32 %v644, 1.0
    %v662 = vadd.f32 %v646, 1.0
    %v663 = vadd.f32 %v648, 1.0
    %v664 = vadd.f32 %v650, 1.0
    %v665 = vadd.f32 %v652, 1.0
    %v666 = vadd.f32 %v654, 1.0
    %v667 = vadd.f32 %v656, 1.0
    %v668 = vrcp.pop %v657
    %v669 = vrcp.pop %v658
    %v670 = vrcp.pop %v659
    %v671 = vrcp.pop %v660
    %v672 = vrcp.pop %v661
    %v673 = vrcp.pop %v662
    %v674 = vrcp.pop %v663
    %v675 = vrcp.pop %v664
    %v676 = vrcp.pop %v665
    %v677 = vrcp.pop %v666
    %v678 = vrcp.pop %v667
    %v690 = vcombine.low %v668, %v669
    %v691 = vcombine.low %v670, %v671
    %v692 = vcombine.low %v672, %v673
    %v693 = vcombine.low %v674, %v675
    %v695 = vunpack.c.l.s4 1966171168
    %v696 = vunpack.c.0.s8 %v695
    %v697 = vlaneseq
    %v698 = vshrl.u32 %v697, 7
    %v699 = vsub.s32 %v696, %v698
    %v700 = vrot.slane %v690, %v699
    %v702 = vunpack.c.l.s4 1966171168
    %v703 = vunpack.c.0.s8 %v702
    %v704 = vlaneseq
    %v705 = vshrl.u32 %v704, 7
    %v706 = vsub.s32 %v703, %v705
    %v707 = vrot.slane %v691, %v706
    %v709 = vunpack.c.l.s4 1966171168
    %v710 = vunpack.c.0.s8 %v709
    %v711 = vlaneseq
    %v712 = vshrl.u32 %v711, 7
    %v713 = vsub.s32 %v710, %v712
    %v714 = vrot.slane %v692, %v713
    %v716 = vunpack.c.l.s4 1966171168
    %v717 = vunpack.c.0.s8 %v716
    %v718 = vlaneseq
    %v719 = vshrl.u32 %v718, 7
    %v720 = vsub.s32 %v717, %v719
    %v721 = vrot.slane %v693, %v720
    %v722 = vcombine.low %v700, %v707
    %v723 = vcombine.low %v714, %v721
    %v725 = vunpack.c.l.s4 1966171168
    %v726 = vunpack.c.0.s8 %v725
    %v727 = vlaneseq
    %v728 = vshrl.u32 %v727, 7
    %v729 = vsub.s32 %v726, %v728
    %v730 = vrot.slane %v722, %v729
    %v732 = vunpack.c.l.s4 1966171168
    %v733 = vunpack.c.0.s8 %v732
    %v734 = vlaneseq
    %v735 = vshrl.u32 %v734, 7
    %v736 = vsub.s32 %v733, %v735
    %v737 = vrot.slane %v723, %v736
    %v738 = vcombine.low %v730, %v737
    %v739 = vcombine.low %v676, %v677
    %v741 = vunpack.c.l.s4 1966171168
    %v742 = vunpack.c.0.s8 %v741
    %v743 = vlaneseq
    %v744 = vshrl.u32 %v743, 7
    %v745 = vsub.s32 %v742, %v744
    %v746 = vrot.slane %v739, %v745
    %v748 = vunpack.c.l.s4 1966171168
    %v749 = vunpack.c.0.s8 %v748
    %v750 = vlaneseq
    %v751 = vshrl.u32 %v750, 7
    %v752 = vsub.s32 %v749, %v751
    %v753 = vrot.slane %v678, %v752
    %v754 = vcombine.low %v746, %v753
    %v756 = vunpack.c.l.s4 1966171168
    %v757 = vunpack.c.0.s8 %v756
    %v758 = vlaneseq
    %v759 = vshrl.u32 %v758, 7
    %v760 = vsub.s32 %v757, %v759
    %v761 = vrot.slane %v754, %v760
    %764 = vst [vmem:[#allocation7] sm:$0xff] %v738
    %v765 = vlaneseq
    %vm766 = vcmp.ge.s32.totalorder %v765, 0
    %vm767 = vcmp.lt.s32.totalorder %v765, 320
    %vm768 = vmand %vm766, %vm767
    %769 = vst.msk [vmem:[#allocation7 + $0x8] sm:$0x7] %vm768, %v761
    // Predicated region
    $region22: #{_lambda_.1} parent=1 // pred_check
      _
    $region23: #{_lambda_.1} parent=1 // pred_check_branch
      %771 = sbr.rel (0) target = $region25
    $region24: #{_lambda_.1} parent=1 // pred_region
      %s773 = ssub.s32 176, 176
      %774 = vsyncadd [#allocation4], %s773
      %s776 = sshll.u32 [#allocation7], 4
      %s777 = int_to_ptr.vmem [resolvable:$true] %s776
      %779 = dma.vmem_to_hbm [thread:$0]  %s777, 176, %s3, [#allocation4]
    $region25: #{_lambda_.1} parent=1 // pred_fallthru
      _
    // Predicated region
    $region26: #{_lambda_.1} parent=1 // pred_check
      _
    $region27: #{_lambda_.1} parent=1 // pred_check_branch
      %781 = sbr.rel (0) target = $region29
    $region28: #{_lambda_.1} parent=1 // pred_region
      %782 = dma.done [#allocation4], 176
    $region29: #{_lambda_.1} parent=1 // pred_fallthru
      _
    %783 = vsyncpa [#allocation3], 1
    %784 = vsyncpa [#allocation6], 1
    %785 = vsyncpa [#allocation4], 1

</llo_original>
